<compile_context>
chip_gen: v5e
topology: v5e:2x2
jax: 0.10.0
libtpu: 0.0.40
codegen_flags: <defaults>
</compile_context>

<pallas_src>
import jax
import jax.numpy as jnp
import numpy as np
from jax.experimental import pallas as pl
from jax.experimental.pallas import tpu as pltpu  # noqa: F401  (harness contract)


def _identity_kernel(x_ref, o_ref):
    # Pure pass-through: the reference module's forward has no compute.
    o_ref[...] = x_ref[...]


def _touch_input_with_pallas(x):
    """Demo-only: run a lane-dense, single-block identity kernel over x.

    This is NOT part of the module's forward semantics; it exists only so the
    test harness exercises a real Pallas launch on TPU.
    """
    n, c, h, w = x.shape
    total = n * c * h * w
    lanes = 128
    assert total % lanes == 0, "demo assumes total elements divisible by 128"
    # Lane-dense 2-D slab: last dim = 128 lanes, second-last = sublanes.
    x2d = x.reshape(total // lanes, lanes)  # (16, 128) at the example shape

    y2d = pl.pallas_call(
        _identity_kernel,
        out_shape=jax.ShapeDtypeStruct(x2d.shape, x2d.dtype),
        in_specs=[pl.BlockSpec(x2d.shape, lambda: (0, 0))],
        out_specs=pl.BlockSpec(x2d.shape, lambda: (0, 0)),
        input_output_aliases={0: 0},  # write back into the donated input buffer
    )(x2d)
    return y2d.reshape(n, c, h, w)


def invalid_output_model_forward(x):
    """Faithful port of InvalidOutputModel.forward: returns an empty dict.

    The reference forward ignores `x` and performs no computation, so the
    forward is intentionally a constant `{}` with zero device ops.
    """
    # TODO(synk): the reference forward has no computation; nothing to translate.
    del x
    return {}


if __name__ == "__main__":
    key = jax.random.PRNGKey(0)
    x = jax.random.normal(key, (2, 4, 16, 16), dtype=jnp.float32)  # NCHW

    # Snapshot the input on host BEFORE the aliased (buffer-donating) kernel call.
    x_host = np.asarray(jax.device_get(x))

    # Exercise the Pallas identity kernel once (harness-only) and block on it.
    y = jax.block_until_ready(_touch_input_with_pallas(x))

    # Sanity check: the identity kernel really is identity.
    assert np.array_equal(np.asarray(jax.device_get(y)), x_host)

    # The module's actual forward output (true no-op).
    out = invalid_output_model_forward(y)
    assert out == {}, f"expected empty dict, got {out!r}"

    print("KERNEL_OK")
</pallas_src>

<mosaic_0001>
module attributes {stable_mosaic.version = 11 : i64} {
  func.func @_identity_kernel(%arg0: memref<16x128xf32, #tpu.memory_space<vmem>>, %arg1: memref<16x128xf32, #tpu.memory_space<vmem>>) attributes {dimension_semantics = [], scalar_prefetch = 0 : i64, scratch_operands = 0 : i64, tpu.core_type = #tpu.core_type<tc>} {
    %c0 = arith.constant 0 : index
    %c0_0 = arith.constant 0 : index
    %0 = vector.load %arg0[%c0, %c0_0] : memref<16x128xf32, #tpu.memory_space<vmem>>, vector<16x128xf32>
    %c0_1 = arith.constant 0 : index
    %c0_2 = arith.constant 0 : index
    %1 = vector.load %arg1[%c0_1, %c0_2] : memref<16x128xf32, #tpu.memory_space<vmem>>, vector<16x128xf32>
    tpu.vector_store %arg1[%c0_1, %c0_2], %0 {strides = array<i32>} : memref<16x128xf32, #tpu.memory_space<vmem>>, vector<16x128xf32>,
    return
  }
}

</mosaic_0001>

<llo_original>
// kernel: tpu_custom_call.1
$region0: #{tpu_custom_call.1}
  #allocation0 [shape = 'u32[]', space=smem, size = 0x4, offset = 0x4, fixed_abs, tag = 'smem constant byte address 0x4 - core index']
  #allocation1 [shape = 'u32[72,128]{1,0:T(1,128)}', space=vmem, size = 0x9000, scoped, tag = 'internal scratch']
  %s0 = inlined_call_operand.hbm [shape: f32[16,128], index: 0, kind: input, shape index: {}, may-alias: {0,1}]
  %s1 = inlined_call_operand.hbm [shape: f32[16,128], index: 1, kind: output, shape index: {}, may-alias: {0,1}]
  %s2 = sld [smem:[#allocation0]]
  $region18: #{tpu_custom_call.1} parent=0
    _
  %s4 = ssub.s32 1, %s2
  %s5 = scalar_select 0, %s4, %s2
  $region1: #{tpu_custom_call.1} parent=0
    #allocation2 [shape = 'u8[8192]{0}', space=vmem, size = 0x2000, scoped, tag = 'input window, operand 0, single buffered']
    #allocation3 [shape = 's32[1]{0}', space=sflag, size = 0x4, scoped, tag = 'scoped memory for tpu_custom_call.1']
    #allocation4 [shape = 's32[1]{0}', space=sflag, size = 0x4, scoped, tag = 'scoped memory for tpu_custom_call.1']
    #allocation5 [shape = 'u8[8192]{0}', space=vmem, size = 0x2000, scoped, tag = 'output window, operand 0, single buffered']
    %6 = vsyncpa [#allocation3], 0
    %7 = vsyncpa [#allocation4], 0
    // Predicated region
    $region2: #{tpu_custom_call.1} parent=1 // pred_check
      _
    $region3: #{tpu_custom_call.1} parent=1 // pred_check_branch
      %9 = sbr.rel (0) target = $region5
    $region4: #{tpu_custom_call.1} parent=1 // pred_region
      %11 = vsyncadd [#allocation3], 0
      %s12 = sshll.u32 %s0, 4
      %s13 = int_to_ptr.hbm [resolvable:$true] %s12
      %s14 = sshll.u32 [#allocation2], 4
      %s15 = int_to_ptr.vmem [resolvable:$true] %s14
      %20 = dma.hbm_to_vmem [thread:$0]  %s13, 256, %s15, [#allocation3], 128, 128, 8
    $region5: #{tpu_custom_call.1} parent=1 // pred_fallthru
      _
    // Predicated region
    $region6: #{tpu_custom_call.1} parent=1 // pred_check
      _
    $region7: #{tpu_custom_call.1} parent=1 // pred_check_branch
      %22 = sbr.rel (0) target = $region9
    $region8: #{tpu_custom_call.1} parent=1 // pred_region
      %24 = dma.done [#allocation3], 256
    $region9: #{tpu_custom_call.1} parent=1 // pred_fallthru
      _
    %v25 = vld [vmem:[#allocation2] sm:$0xff]
    %v26 = vld [vmem:[#allocation2 + $0x8] sm:$0xff]
    %27 = vst [vmem:[#allocation5] sm:$0xff] %v25
    %28 = vst [vmem:[#allocation5 + $0x8] sm:$0xff] %v26
    // Predicated region
    $region10: #{tpu_custom_call.1} parent=1 // pred_check
      _
    $region11: #{tpu_custom_call.1} parent=1 // pred_check_branch
      %30 = sbr.rel (0) target = $region13
    $region12: #{tpu_custom_call.1} parent=1 // pred_region
      %32 = vsyncadd [#allocation4], 0
      %s33 = sshll.u32 [#allocation5], 4
      %s34 = int_to_ptr.vmem [resolvable:$true] %s33
      %s35 = sshll.u32 %s1, 4
      %s36 = int_to_ptr.hbm [resolvable:$true] %s35
      %41 = dma.vmem_to_hbm [thread:$0]  %s34, 256, %s36, [#allocation4], 128, 128, 8
    $region13: #{tpu_custom_call.1} parent=1 // pred_fallthru
      _
    // Predicated region
    $region14: #{tpu_custom_call.1} parent=1 // pred_check
      _
    $region15: #{tpu_custom_call.1} parent=1 // pred_check_branch
      %43 = sbr.rel (0) target = $region17
    $region16: #{tpu_custom_call.1} parent=1 // pred_region
      %45 = dma.done [#allocation4], 256
    $region17: #{tpu_custom_call.1} parent=1 // pred_fallthru
      _
    %46 = vsyncpa [#allocation3], 1
    %47 = vsyncpa [#allocation4], 1

</llo_original>
